<compile_context>
chip_gen: v7x
topology: tpu7x:2x2x1
jax: 0.10.0
libtpu: 0.0.40
codegen_flags: <defaults>
</compile_context>

<pallas_src>
import numpy as np

import jax
import jax.numpy as jnp
from jax.experimental import pallas as pl
from jax.experimental.pallas import tpu as pltpu


# ------------------------------- utilities ---------------------------------

def _round_up(x, m):
    return (x + m - 1) // m * m


_MAX_TM = 1024                      # hard cap on rows per streamed sat tile
_VMEM_LIMIT_CACHE = None


def _vmem_limit_bytes():
    """Per-generation scoped-VMEM limit: ~3/4 of physical, capped at 100 MiB."""
    global _VMEM_LIMIT_CACHE
    if _VMEM_LIMIT_CACHE is None:
        try:
            cap = int(pltpu.get_tpu_info().vmem_capacity_bytes)
            _VMEM_LIMIT_CACHE = max(32 << 20, min(cap * 3 // 4, 100 << 20))
        except Exception:
            # Safe on v5e/v6e (128 MiB physical) and v7x (64 MiB physical).
            _VMEM_LIMIT_CACHE = 48 << 20
    return _VMEM_LIMIT_CACHE


def _tm_cap(k_cols, n_cols, resident_bytes, in_itemsize, vmem_limit):
    """Largest row tile keeping streamed + resident buffers inside VMEM."""
    # Streamed sat tile and output tile are double-buffered by the pipeline.
    per_row = 2 * (k_cols * in_itemsize + n_cols * 4)
    # 2x residents = worst case (fallback path without Buffered(1)); 30% headroom.
    budget = int(vmem_limit * 0.7) - 2 * resident_bytes
    if budget <= 8 * per_row:
        # TODO(synk): tile K (VMEM f32 accumulator) / S when residents alone
        # exceed the VMEM budget; for now clamp to the minimum row tile.
        return 8
    return max(8, min(_MAX_TM, (budget // per_row) // 8 * 8))


def _pick_tm(b8, tm_max):
    """Largest row tile (multiple of 8, <= tm_max) such that
       (a) batch-padding waste is <= b8/8 and
       (b) there are >= 2 grid steps whenever b8 > 8 (v7x dual-TC sharding)."""
    tm_max = max(8, min(tm_max, b8))
    best, tm = 8, 8
    while tm <= tm_max:
        bp = _round_up(b8, tm)
        waste_ok = (bp - b8) * 8 <= b8
        steps_ok = (bp // tm) >= 2 or b8 <= 8
        if waste_ok and steps_ok:
            best = tm
        tm += 8
    return best


def _resident_spec(shape, single_buffer):
    """BlockSpec for a grid-invariant (fully VMEM-resident) operand."""
    index_map = lambda i: (0,) * len(shape)
    if single_buffer:
        # Constant block index -> one buffer is enough; saves VMEM.
        return pl.BlockSpec(shape, index_map, pipeline_mode=pl.Buffered(1))
    return pl.BlockSpec(shape, index_map)


def _run_pallas(kernel, *, out_shape, grid, sat_block, resident_shapes,
                out_block, cost, vmem_limit, args):
    def build(single_buffer_residents):
        in_specs = [pl.BlockSpec(sat_block, lambda i: (i, 0))]
        in_specs += [_resident_spec(s, single_buffer_residents)
                     for s in resident_shapes]
        return pl.pallas_call(
            kernel,
            out_shape=out_shape,
            grid=grid,
            in_specs=in_specs,
            out_specs=pl.BlockSpec(out_block, lambda i: (i, 0)),
            compiler_params=pltpu.CompilerParams(
                dimension_semantics=("parallel",),
                vmem_limit_bytes=vmem_limit),
            cost_estimate=cost,
        )

    try:
        return build(True)(*args)
    except Exception:
        # pipeline_mode=pl.Buffered(1) unsupported on this JAX version ->
        # fall back to default (double-buffered) resident operands.
        return build(False)(*args)


# ----------------------------- Pallas kernels ------------------------------

def _linear_classifier_kernel(sat_ref, w_ref, b_ref, out_ref):
    # logits = sat_h @ W_t + b     (W_t pre-transposed to [K, Cp])
    out_ref[...] = (jnp.dot(sat_ref[...], w_ref[...],
                            preferred_element_type=jnp.float32)
                    + b_ref[...])


def _proj_mm_kernel(sat_ref, w_ref, b_ref, solver_ref, out_ref):
    # h = relu(sat_h) @ W_t + b ; logits = h @ solver_t  (solver pre-transposed)
    h = jnp.maximum(sat_ref[...], 0.0).astype(w_ref.dtype)
    h = jnp.dot(h, w_ref[...], preferred_element_type=jnp.float32) + b_ref[...]
    out_ref[...] = jnp.dot(h.astype(solver_ref.dtype), solver_ref[...],
                           preferred_element_type=jnp.float32)


def _mm_kernel(sat_ref, solver_ref, out_ref):
    # logits = sat_h @ solver_t   (solver pre-transposed in the wrapper)
    out_ref[...] = jnp.dot(sat_ref[...], solver_ref[...],
                           preferred_element_type=jnp.float32)


# ------------------------------ JAX wrapper --------------------------------

class ClassifierDecoder:
    """JAX/Pallas port of the PyTorch ClassifierDecoder (forward only)."""

    def __init__(self, sat_dim, sol_dim, solver_enc_mode, num_classes=7,
                 param_dtype=jnp.float32, key=jax.random.PRNGKey(0)):
        self.solver_enc_mode = solver_enc_mode
        self.sat_dim = sat_dim
        self.sol_dim = sol_dim
        self.num_classes = num_classes
        # TODO(synk): pass param_dtype=jnp.bfloat16 to halve HBM traffic on the
        # mem-bound path (accumulation stays f32 in-kernel) if accuracy permits.
        self.param_dtype = np.dtype(param_dtype)

        k1, k2 = jax.random.split(key)
        if solver_enc_mode == 'none':
            # nn.Linear(sat_dim, num_classes): weight [C, K], bias [C]
            bound = 1.0 / (sat_dim ** 0.5)
            self.cls_w = jax.random.uniform(k1, (num_classes, sat_dim),
                                            jnp.float32, -bound, bound)
            self.cls_b = jax.random.uniform(k2, (num_classes,),
                                            jnp.float32, -bound, bound)
            # Pre-transposed MXU-RHS layout [K, Cp8]; Cp8 = round_up(C, 8)
            # keeps the output narrow (tiny write traffic) instead of 128-wide.
            self._c_pad = _round_up(num_classes, 8)
            pad_c = self._c_pad - num_classes
            self.cls_w_t = jnp.pad(self.cls_w.T,
                                   ((0, 0), (0, pad_c))).astype(self.param_dtype)
            self.cls_b_row = jnp.pad(self.cls_b.reshape(1, num_classes),
                                     ((0, 0), (0, pad_c)))          # f32 [1,Cp8]
        elif sat_dim != sol_dim:
            # nn.Linear(sat_dim, sol_dim): weight [sol_dim, K], bias [sol_dim]
            bound = 1.0 / (sat_dim ** 0.5)
            self.lin_w = jax.random.uniform(k1, (sol_dim, sat_dim),
                                            jnp.float32, -bound, bound)
            self.lin_b = jax.random.uniform(k2, (sol_dim,),
                                            jnp.float32, -bound, bound)
            self.lin_w_t = self.lin_w.T.astype(self.param_dtype)    # [K, D]
            self.lin_b_row = self.lin_b.reshape(1, sol_dim)         # f32 [1,D]

    # ------------------------------------------------------------------ #

    def __call__(self, sat_h, solver_h=None):
        B, K = sat_h.shape
        assert K == self.sat_dim
        itemsize = int(self.param_dtype.itemsize)
        vmem_limit = _vmem_limit_bytes()
        sat_c = (sat_h if sat_h.dtype == self.param_dtype
                 else sat_h.astype(self.param_dtype))
        b8 = _round_up(B, 8)

        # ---------------- branch 1: plain linear classifier ----------------
        if self.solver_enc_mode == 'none':
            Cp = self._c_pad
            resident = K * Cp * itemsize + Cp * 4
            tm = _pick_tm(b8, _tm_cap(K, Cp, resident, itemsize, vmem_limit))
            Bp = _round_up(b8, tm)
            sat_p = sat_c if Bp == B else jnp.pad(sat_c, ((0, Bp - B), (0, 0)))
            cost = pl.CostEstimate(
                flops=2 * Bp * K * Cp, transcendentals=0,
                bytes_accessed=itemsize * (Bp * K + K * Cp) + 4 * (Cp + Bp * Cp))
            out = _run_pallas(
                _linear_classifier_kernel,
                out_shape=jax.ShapeDtypeStruct((Bp, Cp), jnp.float32),
                grid=(Bp // tm,),
                sat_block=(tm, K),
                resident_shapes=[(K, Cp), (1, Cp)],
                out_block=(tm, Cp),
                cost=cost, vmem_limit=vmem_limit,
                args=(sat_p, self.cls_w_t, self.cls_b_row))
            if Bp == B and Cp == self.num_classes:
                return out
            return out[:B, :self.num_classes]

        # ---------------- mm branches: need solver_h -----------------------
        S, D = solver_h.shape
        assert D == self.sol_dim
        solver_c = (solver_h if solver_h.dtype == self.param_dtype
                    else solver_h.astype(self.param_dtype))
        solver_t = solver_c.T            # one XLA transpose -> MXU RHS [D, S]

        if self.sat_dim != self.sol_dim:
            # h = lin(relu(sat_h)); logits = h @ solver_h.T   (fully fused)
            resident = K * D * itemsize + D * 4 + D * S * itemsize
            tm = _pick_tm(b8, _tm_cap(K, S, resident, itemsize, vmem_limit))
            Bp = _round_up(b8, tm)
            sat_p = sat_c if Bp == B else jnp.pad(sat_c, ((0, Bp - B), (0, 0)))
            cost = pl.CostEstimate(
                flops=2 * Bp * K * D + 2 * Bp * D * S, transcendentals=0,
                bytes_accessed=(itemsize * (Bp * K + K * D + D * S)
                                + 4 * (D + Bp * S)))
            out = _run_pallas(
                _proj_mm_kernel,
                out_shape=jax.ShapeDtypeStruct((Bp, S), jnp.float32),
                grid=(Bp // tm,),
                sat_block=(tm, K),
                resident_shapes=[(K, D), (1, D), (D, S)],
                out_block=(tm, S),
                cost=cost, vmem_limit=vmem_limit,
                args=(sat_p, self.lin_w_t, self.lin_b_row, solver_t))
            return out if Bp == B else out[:B]

        # sat_dim == sol_dim: logits = sat_h @ solver_h.T
        assert K == D
        resident = K * S * itemsize
        tm = _pick_tm(b8, _tm_cap(K, S, resident, itemsize, vmem_limit))
        Bp = _round_up(b8, tm)
        sat_p = sat_c if Bp == B else jnp.pad(sat_c, ((0, Bp - B), (0, 0)))
        cost = pl.CostEstimate(
            flops=2 * Bp * K * S, transcendentals=0,
            bytes_accessed=itemsize * (Bp * K + K * S) + 4 * Bp * S)
        out = _run_pallas(
            _mm_kernel,
            out_shape=jax.ShapeDtypeStruct((Bp, S), jnp.float32),
            grid=(Bp // tm,),
            sat_block=(tm, K),
            resident_shapes=[(K, S)],
            out_block=(tm, S),
            cost=cost, vmem_limit=vmem_limit,
            args=(sat_p, solver_t))
        return out if Bp == B else out[:B]


# ------------------------------ reference ----------------------------------

def _reference(dec, sat_h, solver_h=None):
    if dec.solver_enc_mode == 'none':
        return sat_h @ dec.cls_w.T + dec.cls_b
    if dec.sat_dim != dec.sol_dim:
        h = jnp.maximum(sat_h, 0.0) @ dec.lin_w.T + dec.lin_b
        return h @ solver_h.T
    return sat_h @ solver_h.T


# --------------------------------- main -------------------------------------

if __name__ == "__main__":
    key = jax.random.PRNGKey(0)
    k_sat, k_sol, k_sat2, k_p1, k_p2, k_p3 = jax.random.split(key, 6)

    B, S = 8, 8              # batch rows, number of solvers
    sat_dim, sol_dim = 32, 16
    num_classes = 7

    # --- branch 1: solver_enc_mode == 'none' --------------------------------
    dec_none = ClassifierDecoder(sat_dim, sol_dim, 'none',
                                 num_classes=num_classes, key=k_p1)
    sat_h = jax.random.normal(k_sat, (B, sat_dim), jnp.float32)
    out1 = jax.block_until_ready(dec_none(sat_h))
    ref1 = _reference(dec_none, sat_h)
    assert out1.shape == (B, num_classes)
    assert jnp.allclose(out1, ref1, atol=1e-5, rtol=1e-5)

    # --- branch 2: sat_dim != sol_dim (relu -> linear -> mm) -----------------
    dec_proj = ClassifierDecoder(sat_dim, sol_dim, 'mlp',
                                 num_classes=num_classes, key=k_p2)
    solver_h = jax.random.normal(k_sol, (S, sol_dim), jnp.float32)
    out2 = jax.block_until_ready(dec_proj(sat_h, solver_h))
    ref2 = _reference(dec_proj, sat_h, solver_h)
    assert out2.shape == (B, S)
    assert jnp.allclose(out2, ref2, atol=1e-5, rtol=1e-5)

    # --- branch 3: sat_dim == sol_dim (plain mm) -----------------------------
    dec_mm = ClassifierDecoder(sol_dim, sol_dim, 'mlp',
                               num_classes=num_classes, key=k_p3)
    sat_h_eq = jax.random.normal(k_sat2, (B, sol_dim), jnp.float32)
    out3 = jax.block_until_ready(dec_mm(sat_h_eq, solver_h))
    ref3 = _reference(dec_mm, sat_h_eq, solver_h)
    assert out3.shape == (B, S)
    assert jnp.allclose(out3, ref3, atol=1e-5, rtol=1e-5)

    print("KERNEL_OK")
</pallas_src>

<mosaic_0001>
module attributes {stable_mosaic.version = 11 : i64} {
  func.func @_linear_classifier_kernel(%arg0: i32, %arg1: memref<8x32xf32, #tpu.memory_space<vmem>>, %arg2: memref<32x8xf32, #tpu.memory_space<vmem>>, %arg3: memref<1x8xf32, #tpu.memory_space<vmem>>, %arg4: memref<8x8xf32, #tpu.memory_space<vmem>>) attributes {dimension_semantics = [#tpu.dimension_semantics<parallel>], iteration_bounds = array<i64: 1>, scalar_prefetch = 0 : i64, scratch_operands = 0 : i64, tpu.core_type = #tpu.core_type<tc>, window_params = [{transform_indices = @transform_0, window_bounds = array<i64: 8, 32>}, {pipeline_mode = #tpu.pipeline_mode<synchronous>, transform_indices = @transform_1, window_bounds = array<i64: 32, 8>}, {pipeline_mode = #tpu.pipeline_mode<synchronous>, transform_indices = @transform_2, window_bounds = array<i64: 1, 8>}, {transform_indices = @transform_3, window_bounds = array<i64: 8, 8>}]} {
    %c0 = arith.constant 0 : index
    %c0_0 = arith.constant 0 : index
    %0 = vector.load %arg1[%c0, %c0_0] : memref<8x32xf32, #tpu.memory_space<vmem>>, vector<8x32xf32>
    %c0_1 = arith.constant 0 : index
    %c0_2 = arith.constant 0 : index
    %1 = vector.load %arg2[%c0_1, %c0_2] : memref<32x8xf32, #tpu.memory_space<vmem>>, vector<32x8xf32>
    %cst = arith.constant dense<0.000000e+00> : vector<8x8xf32>
    %2 = tpu.matmul %0, %1, %cst {dimension_numbers = #tpu.dot_dimension_numbers<[1], [0], [0], [1], [0, 0, 1, 1], [], []>} : vector<8x32xf32>, vector<32x8xf32>, vector<8x8xf32> -> vector<8x8xf32>
    %c0_3 = arith.constant 0 : index
    %c0_4 = arith.constant 0 : index
    %3 = vector.load %arg3[%c0_3, %c0_4] : memref<1x8xf32, #tpu.memory_space<vmem>>, vector<1x8xf32>
    %4 = vector.broadcast %3 : vector<1x8xf32> to vector<8x8xf32>
    %5 = arith.addf %2, %4 : vector<8x8xf32>
    %c0_5 = arith.constant 0 : index
    %c0_6 = arith.constant 0 : index
    %6 = vector.load %arg4[%c0_5, %c0_6] : memref<8x8xf32, #tpu.memory_space<vmem>>, vector<8x8xf32>
    tpu.vector_store %arg4[%c0_5, %c0_6], %5 {strides = array<i32>} : memref<8x8xf32, #tpu.memory_space<vmem>>, vector<8x8xf32>,
    return
  }
  func.func @transform_0(%arg0: i32) -> (i32, i32) {
    %c0_i32 = arith.constant 0 : i32
    %c0_i32_0 = arith.constant 0 : i32
    return %arg0, %c0_i32 : i32, i32
  }
  func.func @transform_1(%arg0: i32) -> (i32, i32) {
    %c0_i32 = arith.constant 0 : i32
    %c0_i32_0 = arith.constant 0 : i32
    %c0_i32_1 = arith.constant 0 : i32
    return %c0_i32, %c0_i32_0 : i32, i32
  }
  func.func @transform_2(%arg0: i32) -> (i32, i32) {
    %c0_i32 = arith.constant 0 : i32
    %c0_i32_0 = arith.constant 0 : i32
    %c0_i32_1 = arith.constant 0 : i32
    return %c0_i32, %c0_i32_0 : i32, i32
  }
  func.func @transform_3(%arg0: i32) -> (i32, i32) {
    %c0_i32 = arith.constant 0 : i32
    %c0_i32_0 = arith.constant 0 : i32
    return %arg0, %c0_i32 : i32, i32
  }
}

module attributes {stable_mosaic.version = 11 : i64} {
  func.func @_linear_classifier_kernel(%arg0: i32, %arg1: memref<8x32xf32, #tpu.memory_space<vmem>>, %arg2: memref<32x8xf32, #tpu.memory_space<vmem>>, %arg3: memref<1x8xf32, #tpu.memory_space<vmem>>, %arg4: memref<8x8xf32, #tpu.memory_space<vmem>>) attributes {dimension_semantics = [#tpu.dimension_semantics<parallel>], iteration_bounds = array<i64: 1>, scalar_prefetch = 0 : i64, scratch_operands = 0 : i64, tpu.core_type = #tpu.core_type<tc>, window_params = [{transform_indices = @transform_0, window_bounds = array<i64: 8, 32>}, {pipeline_mode = #tpu.pipeline_mode<synchronous>, transform_indices = @transform_1, window_bounds = array<i64: 32, 8>}, {pipeline_mode = #tpu.pipeline_mode<synchronous>, transform_indices = @transform_2, window_bounds = array<i64: 1, 8>}, {transform_indices = @transform_3, window_bounds = array<i64: 8, 8>}]} {
    %c0 = arith.constant 0 : index
    %c0_0 = arith.constant 0 : index
    %0 = vector.load %arg1[%c0, %c0_0] : memref<8x32xf32, #tpu.memory_space<vmem>>, vector<8x32xf32>
    %c0_1 = arith.constant 0 : index
    %c0_2 = arith.constant 0 : index
    %1 = vector.load %arg2[%c0_1, %c0_2] : memref<32x8xf32, #tpu.memory_space<vmem>>, vector<32x8xf32>
    %cst = arith.constant dense<0.000000e+00> : vector<8x8xf32>
    %2 = tpu.matmul %0, %1, %cst {dimension_numbers = #tpu.dot_dimension_numbers<[1], [0], [0], [1], [0, 0, 1, 1], [], []>} : vector<8x32xf32>, vector<32x8xf32>, vector<8x8xf32> -> vector<8x8xf32>
    %c0_3 = arith.constant 0 : index
    %c0_4 = arith.constant 0 : index
    %3 = vector.load %arg3[%c0_3, %c0_4] : memref<1x8xf32, #tpu.memory_space<vmem>>, vector<1x8xf32>
    %4 = vector.broadcast %3 : vector<1x8xf32> to vector<8x8xf32>
    %5 = arith.addf %2, %4 : vector<8x8xf32>
    %c0_5 = arith.constant 0 : index
    %c0_6 = arith.constant 0 : index
    %6 = vector.load %arg4[%c0_5, %c0_6] : memref<8x8xf32, #tpu.memory_space<vmem>>, vector<8x8xf32>
    tpu.vector_store %arg4[%c0_5, %c0_6], %5 {strides = array<i32>} : memref<8x8xf32, #tpu.memory_space<vmem>>, vector<8x8xf32>,
    return
  }
  func.func @transform_0(%arg0: i32) -> (i32, i32) {
    %c0_i32 = arith.constant 0 : i32
    %c0_i32_0 = arith.constant 0 : i32
    return %arg0, %c0_i32 : i32, i32
  }
  func.func @transform_1(%arg0: i32) -> (i32, i32) {
    %c0_i32 = arith.constant 0 : i32
    %c0_i32_0 = arith.constant 0 : i32
    %c0_i32_1 = arith.constant 0 : i32
    return %c0_i32, %c0_i32_0 : i32, i32
  }
  func.func @transform_2(%arg0: i32) -> (i32, i32) {
    %c0_i32 = arith.constant 0 : i32
    %c0_i32_0 = arith.constant 0 : i32
    %c0_i32_1 = arith.constant 0 : i32
    return %c0_i32, %c0_i32_0 : i32, i32
  }
  func.func @transform_3(%arg0: i32) -> (i32, i32) {
    %c0_i32 = arith.constant 0 : i32
    %c0_i32_0 = arith.constant 0 : i32
    return %arg0, %c0_i32 : i32, i32
  }
}

</mosaic_0001>

<llo_original>
// kernel: tpu_custom_call.1
$region0: #{tpu_custom_call.1}
  #allocation0 [shape = 'u32[]', space=smem, size = 0x4, offset = 0x4, fixed_abs, tag = 'smem constant byte address 0x4 - core index']
  #allocation1 [shape = 'u32[144,128]{1,0:T(1,128)}', space=vmem, size = 0x12000, scoped, tag = 'internal scratch']
  %s0 = inlined_call_operand.vmem [shape: f32[8,32], index: 0, kind: input, shape index: {}]
  %s1 = inlined_call_operand.vmem [shape: f32[32,8], index: 1, kind: input, shape index: {}]
  %s2 = inlined_call_operand.vmem [shape: f32[1,8], index: 2, kind: input, shape index: {}]
  %s3 = inlined_call_operand.hbm [shape: f32[8,8], index: 3, kind: output, shape index: {}]
  %s4 = sld [smem:[#allocation0]]
  $region22: #{tpu_custom_call.1} parent=0
    _
  %s6 = ssub.s32 1, %s4
  %s7 = scalar_select 0, %s6, %s4
  $region1: #{tpu_custom_call.1} parent=0
    #allocation2 [shape = 'u8[4096]{0}', space=vmem, size = 0x1000, scoped, tag = 'output window, operand 0, single buffered']
    #allocation3 [shape = 's32[1]{0}', space=sflag, size = 0x4, scoped, tag = 'scoped memory for tpu_custom_call.1']
    %8 = vsyncpa [#allocation3], 0
    // Predicated region
    $region2: #{tpu_custom_call.1} parent=1 // pred_check
      _
    $region3: #{tpu_custom_call.1} parent=1 // pred_check_branch
      %10 = sbr.rel (0) target = $region5
    $region4: #{tpu_custom_call.1} parent=1 // pred_region
      _
    $region5: #{tpu_custom_call.1} parent=1 // pred_fallthru
      _
    // Predicated region
    $region6: #{tpu_custom_call.1} parent=1 // pred_check
      _
    $region7: #{tpu_custom_call.1} parent=1 // pred_check_branch
      %12 = sbr.rel (0) target = $region9
    $region8: #{tpu_custom_call.1} parent=1 // pred_region
      _
    $region9: #{tpu_custom_call.1} parent=1 // pred_fallthru
      _
    // Predicated region
    $region10: #{tpu_custom_call.1} parent=1 // pred_check
      _
    $region11: #{tpu_custom_call.1} parent=1 // pred_check_branch
      %14 = sbr.rel (0) target = $region13
    $region12: #{tpu_custom_call.1} parent=1 // pred_region
      _
    $region13: #{tpu_custom_call.1} parent=1 // pred_fallthru
      _
    %v15 = vld [vmem:[%s0] sm:$0xff]
    %v16 = vld [vmem:[%s1] sm:$0xff]
    %v17 = vld [vmem:[%s1 + $0x8] sm:$0xff]
    %v18 = vld [vmem:[%s1 + $0x10] sm:$0xff]
    %v19 = vld [vmem:[%s1 + $0x18] sm:$0xff]
    %v20 = vld [vmem:[%s2] sm:$0x1]
    %v22 = vlaneseq
    %v23 = vshrl.u32 %v22, 7
    %v24 = vsub.s32 0, %v23
    %v25 = vrot.slane %v20, %v24
    %vm27 = vcmask 261120
    %v29 = vsel %vm27, %v15, 0
    %31 = vmatprep.subr.mxu0 0.0
    %32 = vmatpush1.msra.mxu0 %v16
    %33 = vmatprep.subr.mxu0 0.0
    %34 = vmatpush1.msra.mxu0 %v17
    %35 = vmatprep.subr.mxu0 0.0
    %36 = vmatpush1.msra.mxu0 %v18
    %37 = vmatprep.subr.mxu0 0.0
    %38 = vmatpush1.msra.mxu0 %v19
    %39 = vmatprep.subr.mxu0 0.0
    %40 = vmatpush1.msra.mxu0 0.0
    %41 = vmatprep.subr.mxu0 0.0
    %42 = vmatpush1.msra.mxu0 0.0
    %43 = vmatprep.subr.mxu0 0.0
    %44 = vmatpush1.msra.mxu0 0.0
    %45 = vmatprep.subr.mxu0 0.0
    %46 = vmatpush1.msra.mxu0 0.0
    %47 = vmatprep.subr.mxu0 0.0
    %48 = vmatpush1.msra.mxu0 0.0
    %49 = vmatprep.subr.mxu0 0.0
    %50 = vmatpush1.msra.mxu0 0.0
    %51 = vmatprep.subr.mxu0 0.0
    %52 = vmatpush1.msra.mxu0 0.0
    %53 = vmatprep.subr.mxu0 0.0
    %54 = vmatpush1.msra.mxu0 0.0
    %55 = vmatprep.subr.mxu0 0.0
    %56 = vmatpush1.msra.mxu0 0.0
    %57 = vmatprep.subr.mxu0 0.0
    %58 = vmatpush1.msra.mxu0 0.0
    %59 = vmatprep.subr.mxu0 0.0
    %60 = vmatpush1.msra.mxu0 0.0
    %61 = vmatprep.subr.mxu0 0.0
    %62 = vmatpush1.msra.mxu0 0.0
    %63 = vmatprep.subr.mxu0 0.0
    %64 = vmatpush1.msra.mxu0 0.0
    %65 = vmatprep.subr.mxu0 0.0
    %66 = vmatpush1.msra.mxu0 0.0
    %67 = vmatprep.subr.mxu0 0.0
    %68 = vmatpush1.msra.mxu0 0.0
    %69 = vmatprep.subr.mxu0 0.0
    %70 = vmatpush1.msra.mxu0 0.0
    %71 = vmatprep.subr.mxu0 0.0
    %72 = vmatpush1.msra.mxu0 0.0
    %73 = vmatprep.subr.mxu0 0.0
    %74 = vmatpush1.msra.mxu0 0.0
    %75 = vmatprep.subr.mxu0 0.0
    %76 = vmatpush1.msra.mxu0 0.0
    %77 = vmatprep.subr.mxu0 0.0
    %78 = vmatpush1.msra.mxu0 0.0
    %79 = vmatprep.subr.mxu0 0.0
    %80 = vmatpush1.msra.mxu0 0.0
    %81 = vmatprep.subr.mxu0 0.0
    %82 = vmatpush1.msra.mxu0 0.0
    %83 = vmatprep.subr.mxu0 0.0
    %84 = vmatpush1.msra.mxu0 0.0
    %85 = vmatprep.subr.mxu0 0.0
    %86 = vmatpush1.msra.mxu0 0.0
    %87 = vmatprep.subr.mxu0 0.0
    %88 = vmatpush1.msra.mxu0 0.0
    %89 = vmatprep.subr.mxu0 0.0
    %90 = vmatpush1.msra.mxu0 0.0
    %91 = vmatprep.subr.mxu0 0.0
    %92 = vmatpush1.msra.mxu0 0.0
    %93 = vmatprep.subr.mxu0 0.0
    %94 = vmatpush1.msra.mxu0 0.0
    %95 = vmatprep.mubr.f32.mxu0 0.0
    %96 = vmatmul.mubr.f32.gmra.mrb[0].mxu0 %v29
    %v97 = vpop.f32.mrb[0].mxu0
    %v98 = vadd.f32 %v25, %v97
    %v99 = vpop.f32.mrb[0].mxu0
    %100 = vdwg.mxu0
    %vm101 = vcmask 64512
    %102 = vst.msk [vmem:[#allocation2] sm:$0xff] %vm101, %v98
    // Predicated region
    $region14: #{tpu_custom_call.1} parent=1 // pred_check
      _
    $region15: #{tpu_custom_call.1} parent=1 // pred_check_branch
      %104 = sbr.rel (0) target = $region17
    $region16: #{tpu_custom_call.1} parent=1 // pred_region
      %s106 = ssub.s32 128, 128
      %107 = vsyncadd [#allocation3], %s106
      %s109 = sshll.u32 [#allocation2], 4
      %s110 = int_to_ptr.vmem [resolvable:$true] %s109
      %112 = dma.vmem_to_hbm [thread:$0]  %s110, 128, %s3, [#allocation3]
    $region17: #{tpu_custom_call.1} parent=1 // pred_fallthru
      _
    // Predicated region
    $region18: #{tpu_custom_call.1} parent=1 // pred_check
      _
    $region19: #{tpu_custom_call.1} parent=1 // pred_check_branch
      %114 = sbr.rel (0) target = $region21
    $region20: #{tpu_custom_call.1} parent=1 // pred_region
      %115 = dma.done [#allocation3], 128
    $region21: #{tpu_custom_call.1} parent=1 // pred_fallthru
      _
    %116 = vsyncpa [#allocation3], 1

// kernel: tpu_custom_call.1
$region0: #{tpu_custom_call.1}
  #allocation0 [shape = 'u32[]', space=smem, size = 0x4, offset = 0x4, fixed_abs, tag = 'smem constant byte address 0x4 - core index']
  #allocation1 [shape = 'u32[144,128]{1,0:T(1,128)}', space=vmem, size = 0x12000, scoped, tag = 'internal scratch']
  %s0 = inlined_call_operand.vmem [shape: f32[8,32], index: 0, kind: input, shape index: {}]
  %s1 = inlined_call_operand.vmem [shape: f32[32,8], index: 1, kind: input, shape index: {}]
  %s2 = inlined_call_operand.vmem [shape: f32[1,8], index: 2, kind: input, shape index: {}]
  %s3 = inlined_call_operand.hbm [shape: f32[8,8], index: 3, kind: output, shape index: {}]
  %s4 = sld [smem:[#allocation0]]
  $region22: #{tpu_custom_call.1} parent=0
    _
  %s6 = ssub.s32 1, %s4
  %s7 = scalar_select 0, %s6, %s4
  $region1: #{tpu_custom_call.1} parent=0
    #allocation2 [shape = 'u8[4096]{0}', space=vmem, size = 0x1000, scoped, tag = 'output window, operand 0, single buffered']
    #allocation3 [shape = 's32[1]{0}', space=sflag, size = 0x4, scoped, tag = 'scoped memory for tpu_custom_call.1']
    %8 = vsyncpa [#allocation3], 0
    // Predicated region
    $region2: #{tpu_custom_call.1} parent=1 // pred_check
      _
    $region3: #{tpu_custom_call.1} parent=1 // pred_check_branch
      %10 = sbr.rel (0) target = $region5
    $region4: #{tpu_custom_call.1} parent=1 // pred_region
      _
    $region5: #{tpu_custom_call.1} parent=1 // pred_fallthru
      _
    // Predicated region
    $region6: #{tpu_custom_call.1} parent=1 // pred_check
      _
    $region7: #{tpu_custom_call.1} parent=1 // pred_check_branch
      %12 = sbr.rel (0) target = $region9
    $region8: #{tpu_custom_call.1} parent=1 // pred_region
      _
    $region9: #{tpu_custom_call.1} parent=1 // pred_fallthru
      _
    // Predicated region
    $region10: #{tpu_custom_call.1} parent=1 // pred_check
      _
    $region11: #{tpu_custom_call.1} parent=1 // pred_check_branch
      %14 = sbr.rel (0) target = $region13
    $region12: #{tpu_custom_call.1} parent=1 // pred_region
      _
    $region13: #{tpu_custom_call.1} parent=1 // pred_fallthru
      _
    %v15 = vld [vmem:[%s0] sm:$0xff]
    %v16 = vld [vmem:[%s1] sm:$0xff]
    %v17 = vld [vmem:[%s1 + $0x8] sm:$0xff]
    %v18 = vld [vmem:[%s1 + $0x10] sm:$0xff]
    %v19 = vld [vmem:[%s1 + $0x18] sm:$0xff]
    %v20 = vld [vmem:[%s2] sm:$0x1]
    %v22 = vlaneseq
    %v23 = vshrl.u32 %v22, 7
    %v24 = vsub.s32 0, %v23
    %v25 = vrot.slane %v20, %v24
    %vm27 = vcmask 261120
    %v29 = vsel %vm27, %v15, 0
    %31 = vmatprep.subr.mxu0 0.0
    %32 = vmatpush1.msra.mxu0 %v16
    %33 = vmatprep.subr.mxu0 0.0
    %34 = vmatpush1.msra.mxu0 %v17
    %35 = vmatprep.subr.mxu0 0.0
    %36 = vmatpush1.msra.mxu0 %v18
    %37 = vmatprep.subr.mxu0 0.0
    %38 = vmatpush1.msra.mxu0 %v19
    %39 = vmatprep.subr.mxu0 0.0
    %40 = vmatpush1.msra.mxu0 0.0
    %41 = vmatprep.subr.mxu0 0.0
    %42 = vmatpush1.msra.mxu0 0.0
    %43 = vmatprep.subr.mxu0 0.0
    %44 = vmatpush1.msra.mxu0 0.0
    %45 = vmatprep.subr.mxu0 0.0
    %46 = vmatpush1.msra.mxu0 0.0
    %47 = vmatprep.subr.mxu0 0.0
    %48 = vmatpush1.msra.mxu0 0.0
    %49 = vmatprep.subr.mxu0 0.0
    %50 = vmatpush1.msra.mxu0 0.0
    %51 = vmatprep.subr.mxu0 0.0
    %52 = vmatpush1.msra.mxu0 0.0
    %53 = vmatprep.subr.mxu0 0.0
    %54 = vmatpush1.msra.mxu0 0.0
    %55 = vmatprep.subr.mxu0 0.0
    %56 = vmatpush1.msra.mxu0 0.0
    %57 = vmatprep.subr.mxu0 0.0
    %58 = vmatpush1.msra.mxu0 0.0
    %59 = vmatprep.subr.mxu0 0.0
    %60 = vmatpush1.msra.mxu0 0.0
    %61 = vmatprep.subr.mxu0 0.0
    %62 = vmatpush1.msra.mxu0 0.0
    %63 = vmatprep.subr.mxu0 0.0
    %64 = vmatpush1.msra.mxu0 0.0
    %65 = vmatprep.subr.mxu0 0.0
    %66 = vmatpush1.msra.mxu0 0.0
    %67 = vmatprep.subr.mxu0 0.0
    %68 = vmatpush1.msra.mxu0 0.0
    %69 = vmatprep.subr.mxu0 0.0
    %70 = vmatpush1.msra.mxu0 0.0
    %71 = vmatprep.subr.mxu0 0.0
    %72 = vmatpush1.msra.mxu0 0.0
    %73 = vmatprep.subr.mxu0 0.0
    %74 = vmatpush1.msra.mxu0 0.0
    %75 = vmatprep.subr.mxu0 0.0
    %76 = vmatpush1.msra.mxu0 0.0
    %77 = vmatprep.subr.mxu0 0.0
    %78 = vmatpush1.msra.mxu0 0.0
    %79 = vmatprep.subr.mxu0 0.0
    %80 = vmatpush1.msra.mxu0 0.0
    %81 = vmatprep.subr.mxu0 0.0
    %82 = vmatpush1.msra.mxu0 0.0
    %83 = vmatprep.subr.mxu0 0.0
    %84 = vmatpush1.msra.mxu0 0.0
    %85 = vmatprep.subr.mxu0 0.0
    %86 = vmatpush1.msra.mxu0 0.0
    %87 = vmatprep.subr.mxu0 0.0
    %88 = vmatpush1.msra.mxu0 0.0
    %89 = vmatprep.subr.mxu0 0.0
    %90 = vmatpush1.msra.mxu0 0.0
    %91 = vmatprep.subr.mxu0 0.0
    %92 = vmatpush1.msra.mxu0 0.0
    %93 = vmatprep.subr.mxu0 0.0
    %94 = vmatpush1.msra.mxu0 0.0
    %95 = vmatprep.mubr.f32.mxu0 0.0
    %96 = vmatmul.mubr.f32.gmra.mrb[0].mxu0 %v29
    %v97 = vpop.f32.mrb[0].mxu0
    %v98 = vadd.f32 %v25, %v97
    %v99 = vpop.f32.mrb[0].mxu0
    %100 = vdwg.mxu0
    %vm101 = vcmask 64512
    %102 = vst.msk [vmem:[#allocation2] sm:$0xff] %vm101, %v98
    // Predicated region
    $region14: #{tpu_custom_call.1} parent=1 // pred_check
      _
    $region15: #{tpu_custom_call.1} parent=1 // pred_check_branch
      %104 = sbr.rel (0) target = $region17
    $region16: #{tpu_custom_call.1} parent=1 // pred_region
      %s106 = ssub.s32 128, 128
      %107 = vsyncadd [#allocation3], %s106
      %s109 = sshll.u32 [#allocation2], 4
      %s110 = int_to_ptr.vmem [resolvable:$true] %s109
      %112 = dma.vmem_to_hbm [thread:$0]  %s110, 128, %s3, [#allocation3]
    $region17: #{tpu_custom_call.1} parent=1 // pred_fallthru
      _
    // Predicated region
    $region18: #{tpu_custom_call.1} parent=1 // pred_check
      _
    $region19: #{tpu_custom_call.1} parent=1 // pred_check_branch
      %114 = sbr.rel (0) target = $region21
    $region20: #{tpu_custom_call.1} parent=1 // pred_region
      %115 = dma.done [#allocation3], 128
    $region21: #{tpu_custom_call.1} parent=1 // pred_fallthru
      _
    %116 = vsyncpa [#allocation3], 1

</llo_original>
